<compile_context>
chip_gen: v5e
topology: v5e:2x2
jax: 0.10.0
libtpu: 0.0.40
codegen_flags: <defaults>
</compile_context>

<pallas_src>
import jax
import jax.numpy as jnp
import numpy as np
from jax.experimental import pallas as pl
from jax.experimental.pallas import tpu as pltpu


# ----------------------------- weight-slab layout ---------------------------
# All weights stored transposed (in, out); rows are 8-aligned for the big blocks.
R_W1 = 0        # (56, 64)   mlp1
R_W2 = 56       # (64, 32)   mlp2
R_WH = 120      # (32, 48)   [mlp1_1 | mlp2_1 | mlp3_1] fused
R_W1222 = 152   # (48, 7)    block-diag [mlp1_2 ; mlp2_2] acting on `heads`
R_W32A = 200    # (7, 8)     mlp3_2 rows for [x1 | x2]
R_W32B = 208    # (48, 8)    mlp3_2 rows for x3h (zero-padded to act on `heads`)
R_W33 = 256     # (8, 3)     mlp3_3
R_B1, R_B2, R_BH, R_B1222, R_B32, R_B33 = 264, 265, 266, 267, 268, 269
SLAB_ROWS = 272
SLAB_COLS = 128
OUT_WIDTH = 128  # lane-dense packed output width


def _round_up(n, m):
    return ((n + m - 1) // m) * m


def _sigmoid(z):
    # exp on the EUP; approx reciprocal also runs on the EUP slot (VPU stays free).
    return pl.reciprocal(1.0 + jnp.exp(-z), approx=True)


# --------------------------------- kernel ----------------------------------
def dnn_kernel(x_ref, slab_ref, out_ref):
    f32 = jnp.float32
    x = x_ref[...]                                                     # (TB, 56)

    # mlp1: Linear(56,64) -> Dropout(p=0.2) [eval: identity] -> ReLU
    w1 = slab_ref[R_W1:R_W1 + 56, 0:64]
    b1 = slab_ref[R_B1:R_B1 + 1, 0:64]
    h = jnp.maximum(jnp.dot(x, w1, preferred_element_type=f32) + b1, 0.0)

    # mlp2: Linear(64,32) -> Dropout(p=0.1) [eval: identity] -> Sigmoid
    w2 = slab_ref[R_W2:R_W2 + 64, 0:32]
    b2 = slab_ref[R_B2:R_B2 + 1, 0:32]
    h = _sigmoid(jnp.dot(h, w2, preferred_element_type=f32) + b2)      # (TB, 32)

    # fused heads: mlp1_1 | mlp2_1 | mlp3_1 in one (32,48) matmul
    wh = slab_ref[R_WH:R_WH + 32, 0:48]
    bh = slab_ref[R_BH:R_BH + 1, 0:48]
    heads = _sigmoid(jnp.dot(h, wh, preferred_element_type=f32) + bh)  # (TB, 48)
    # lanes 0:16 = x1h, 16:32 = x2h, 32:48 = x3h

    # fused mlp1_2 / mlp2_2: block-diagonal (48,7) weight -> [x1(0:5) | x2(5:7)]
    w1222 = slab_ref[R_W1222:R_W1222 + 48, 0:7]
    b1222 = slab_ref[R_B1222:R_B1222 + 1, 0:7]
    x12 = _sigmoid(jnp.dot(heads, w1222, preferred_element_type=f32) + b1222)

    # mlp3_2 on cat([x1, x2, x3h]) as a concat-free split matmul
    w32a = slab_ref[R_W32A:R_W32A + 7, 0:8]
    w32b = slab_ref[R_W32B:R_W32B + 48, 0:8]   # zero rows for x1h/x2h lanes
    b32 = slab_ref[R_B32:R_B32 + 1, 0:8]
    z = (jnp.dot(x12, w32a, preferred_element_type=f32)
         + jnp.dot(heads, w32b, preferred_element_type=f32) + b32)
    x3 = _sigmoid(z)                                                   # (TB, 8)

    # mlp3_3: Linear(8,3) -> Sigmoid
    w33 = slab_ref[R_W33:R_W33 + 8, 0:3]
    b33 = slab_ref[R_B33:R_B33 + 1, 0:3]
    x3 = _sigmoid(jnp.dot(x3, w33, preferred_element_type=f32) + b33)  # (TB, 3)

    # lane-dense packed output: [x1(0:5) | x2(5:7) | x3(7:10) | zeros] -> 128 lanes
    pad = jnp.zeros((x12.shape[0], OUT_WIDTH - 10), f32)
    out_ref[...] = jnp.concatenate([x12, x3, pad], axis=1)


# ------------------------------ parameter prep ------------------------------
def init_params(key):
    """Deterministic synthetic parameters; weights stored transposed as (in, out)."""
    layer_dims = [("1", 56, 64), ("2", 64, 32),
                  ("11", 32, 16), ("12", 16, 5),
                  ("21", 32, 16), ("22", 16, 2),
                  ("31", 32, 16), ("32", 23, 8), ("33", 8, 3)]
    params = {}
    for name, fin, fout in layer_dims:
        key, kw, kb = jax.random.split(key, 3)
        params["w" + name] = jax.random.normal(kw, (fin, fout), jnp.float32) * 0.1
        params["b" + name] = jax.random.normal(kb, (1, fout), jnp.float32) * 0.1
    return params


def _pack_params(p):
    """Fuse head layers and pack all weights/biases into one (272,128) f32 slab."""
    w_heads = jnp.concatenate([p["w11"], p["w21"], p["w31"]], axis=1)    # (32, 48)
    b_heads = jnp.concatenate([p["b11"], p["b21"], p["b31"]], axis=1)    # (1, 48)

    # block-diagonal fusion of mlp1_2 (16->5) and mlp2_2 (16->2), acting on `heads`
    w1222 = jnp.zeros((48, 7), jnp.float32)
    w1222 = w1222.at[0:16, 0:5].set(p["w12"])
    w1222 = w1222.at[16:32, 5:7].set(p["w22"])
    b1222 = jnp.concatenate([p["b12"], p["b22"]], axis=1)                # (1, 7)

    # mlp3_2 split: cat([x1,x2,x3h]) @ w32 == x12 @ w32[:7] + heads @ w32b_pad
    w32a = p["w32"][0:7, :]                                              # (7, 8)
    w32b = jnp.zeros((48, 8), jnp.float32).at[32:48, :].set(p["w32"][7:23, :])

    slab = jnp.zeros((SLAB_ROWS, SLAB_COLS), jnp.float32)
    for arr, row in [
        (p["w1"], R_W1), (p["w2"], R_W2), (w_heads, R_WH), (w1222, R_W1222),
        (w32a, R_W32A), (w32b, R_W32B), (p["w33"], R_W33),
        (p["b1"], R_B1), (p["b2"], R_B2), (b_heads, R_BH),
        (b1222, R_B1222), (p["b32"], R_B32), (p["b33"], R_B33),
    ]:
        slab = slab.at[row:row + arr.shape[0], 0:arr.shape[1]].set(arr)
    return slab


# -------------------------------- wrapper -----------------------------------
def dnn_forward(x, params, *, max_tile=1024):
    B = x.shape[0]
    slab = _pack_params(params)

    TB = min(max_tile, _round_up(B, 8))          # batch tile (multiple of 8)
    B_pad = _round_up(B, TB)
    if B_pad != B:
        x = jnp.pad(x, ((0, B_pad - B), (0, 0)))
    grid = (B_pad // TB,)

    flops_per_row = 2 * (56 * 64 + 64 * 32 + 32 * 48 + 48 * 7 + 7 * 8 + 48 * 8 + 8 * 3)
    transcendentals = 2 * B_pad * (32 + 48 + 7 + 8 + 3)   # exp + approx rcp per sigmoid
    bytes_accessed = B_pad * (56 + OUT_WIDTH) * 4 + SLAB_ROWS * SLAB_COLS * 4

    out = pl.pallas_call(
        dnn_kernel,
        out_shape=jax.ShapeDtypeStruct((B_pad, OUT_WIDTH), jnp.float32),
        grid=grid,
        in_specs=[
            pl.BlockSpec((TB, 56), lambda i: (i, 0)),                 # activations tile
            pl.BlockSpec((SLAB_ROWS, SLAB_COLS), lambda i: (0, 0)),   # resident weights
        ],
        out_specs=pl.BlockSpec((TB, OUT_WIDTH), lambda i: (i, 0)),
        compiler_params=pltpu.CompilerParams(
            dimension_semantics=("parallel",)),
        cost_estimate=pl.CostEstimate(
            flops=B_pad * flops_per_row,
            transcendentals=transcendentals,
            bytes_accessed=bytes_accessed),
    )(x, slab)

    return out[:B, 0:5], out[:B, 5:7], out[:B, 7:10]


# ------------------------------ pure-JAX reference ---------------------------
def dnn_reference(x, params):
    """Pure-JAX reference mirroring the PyTorch forward (eval mode)."""
    p = params
    h = jnp.maximum(x @ p["w1"] + p["b1"], 0.0)
    h = jax.nn.sigmoid(h @ p["w2"] + p["b2"])
    x1 = jax.nn.sigmoid(h @ p["w11"] + p["b11"])
    x1 = jax.nn.sigmoid(x1 @ p["w12"] + p["b12"])
    x2 = jax.nn.sigmoid(h @ p["w21"] + p["b21"])
    x2 = jax.nn.sigmoid(x2 @ p["w22"] + p["b22"])
    x3 = jax.nn.sigmoid(h @ p["w31"] + p["b31"])
    cat = jnp.concatenate([x1, x2, x3], axis=1)
    x3 = jax.nn.sigmoid(cat @ p["w32"] + p["b32"])
    x3 = jax.nn.sigmoid(x3 @ p["w33"] + p["b33"])
    return x1, x2, x3


if __name__ == "__main__":
    key = jax.random.PRNGKey(0)
    key_x, key_p, key_xb = jax.random.split(key, 3)

    params = init_params(key_p)

    # small batch (single tile)
    x = jax.random.normal(key_x, (8, 56), jnp.float32)
    out = jax.block_until_ready(dnn_forward(x, params))
    ref = dnn_reference(x, params)
    for o, r in zip(out, ref):
        np.testing.assert_allclose(np.asarray(o), np.asarray(r), rtol=5e-3, atol=5e-3)

    # multi-tile grid + tail-padding path (B=300 not a multiple of the 128-row tile)
    xb = jax.random.normal(key_xb, (300, 56), jnp.float32)
    outb = jax.block_until_ready(dnn_forward(xb, params, max_tile=128))
    refb = dnn_reference(xb, params)
    for o, r in zip(outb, refb):
        np.testing.assert_allclose(np.asarray(o), np.asarray(r), rtol=5e-3, atol=5e-3)

    print("KERNEL_OK")
</pallas_src>

<mosaic_0001>
module attributes {stable_mosaic.version = 11 : i64} {
  func.func @dnn_kernel(%arg0: i32, %arg1: memref<8x56xf32, #tpu.memory_space<vmem>>, %arg2: memref<272x128xf32, #tpu.memory_space<vmem>>, %arg3: memref<8x128xf32, #tpu.memory_space<vmem>>) attributes {dimension_semantics = [#tpu.dimension_semantics<parallel>], iteration_bounds = array<i64: 1>, scalar_prefetch = 0 : i64, scratch_operands = 0 : i64, tpu.core_type = #tpu.core_type<tc>, window_params = [{transform_indices = @transform_0, window_bounds = array<i64: 8, 56>}, {pipeline_mode = #tpu.pipeline_mode<synchronous>, transform_indices = @transform_1, window_bounds = array<i64: 272, 128>}, {transform_indices = @transform_2, window_bounds = array<i64: 8, 128>}]} {
    %c0 = arith.constant 0 : index
    %c0_0 = arith.constant 0 : index
    %0 = vector.load %arg1[%c0, %c0_0] : memref<8x56xf32, #tpu.memory_space<vmem>>, vector<8x56xf32>
    %c0_1 = arith.constant 0 : index
    %c0_2 = arith.constant 0 : index
    %1 = vector.load %arg2[%c0_1, %c0_2] : memref<272x128xf32, #tpu.memory_space<vmem>>, vector<56x64xf32>
    %c264 = arith.constant 264 : index
    %c0_3 = arith.constant 0 : index
    %2 = vector.load %arg2[%c264, %c0_3] : memref<272x128xf32, #tpu.memory_space<vmem>>, vector<1x64xf32>
    %cst = arith.constant dense<0.000000e+00> : vector<8x64xf32>
    %3 = tpu.matmul %0, %1, %cst {dimension_numbers = #tpu.dot_dimension_numbers<[1], [0], [0], [1], [0, 0, 1, 1], [], []>} : vector<8x56xf32>, vector<56x64xf32>, vector<8x64xf32> -> vector<8x64xf32>
    %4 = vector.broadcast %2 : vector<1x64xf32> to vector<8x64xf32>
    %5 = arith.addf %3, %4 : vector<8x64xf32>
    %cst_4 = arith.constant 0.000000e+00 : f32
    %6 = vector.broadcast %cst_4 : f32 to vector<8x64xf32>
    %7 = arith.maximumf %5, %6 : vector<8x64xf32>
    %c56 = arith.constant 56 : index
    %c0_5 = arith.constant 0 : index
    %8 = vector.load %arg2[%c56, %c0_5] : memref<272x128xf32, #tpu.memory_space<vmem>>, vector<64x32xf32>
    %c265 = arith.constant 265 : index
    %c0_6 = arith.constant 0 : index
    %9 = vector.load %arg2[%c265, %c0_6] : memref<272x128xf32, #tpu.memory_space<vmem>>, vector<1x32xf32>
    %cst_7 = arith.constant dense<0.000000e+00> : vector<8x32xf32>
    %10 = tpu.matmul %7, %8, %cst_7 {dimension_numbers = #tpu.dot_dimension_numbers<[1], [0], [0], [1], [0, 0, 1, 1], [], []>} : vector<8x64xf32>, vector<64x32xf32>, vector<8x32xf32> -> vector<8x32xf32>
    %11 = vector.broadcast %9 : vector<1x32xf32> to vector<8x32xf32>
    %12 = arith.addf %10, %11 : vector<8x32xf32>
    %cst_8 = arith.constant 0.000000e+00 : f32
    %13 = vector.broadcast %cst_8 : f32 to vector<8x32xf32>
    %14 = arith.subf %13, %12 : vector<8x32xf32>
    %15 = math.exp %14 : vector<8x32xf32>
    %cst_9 = arith.constant 1.000000e+00 : f32
    %16 = vector.broadcast %cst_9 : f32 to vector<8x32xf32>
    %17 = arith.addf %16, %15 : vector<8x32xf32>
    %18 = tpu.reciprocal %17 {approx = true} : vector<8x32xf32> -> vector<8x32xf32>
    %c120 = arith.constant 120 : index
    %c0_10 = arith.constant 0 : index
    %19 = vector.load %arg2[%c120, %c0_10] : memref<272x128xf32, #tpu.memory_space<vmem>>, vector<32x48xf32>
    %c266 = arith.constant 266 : index
    %c0_11 = arith.constant 0 : index
    %20 = vector.load %arg2[%c266, %c0_11] : memref<272x128xf32, #tpu.memory_space<vmem>>, vector<1x48xf32>
    %cst_12 = arith.constant dense<0.000000e+00> : vector<8x48xf32>
    %21 = tpu.matmul %18, %19, %cst_12 {dimension_numbers = #tpu.dot_dimension_numbers<[1], [0], [0], [1], [0, 0, 1, 1], [], []>} : vector<8x32xf32>, vector<32x48xf32>, vector<8x48xf32> -> vector<8x48xf32>
    %22 = vector.broadcast %20 : vector<1x48xf32> to vector<8x48xf32>
    %23 = arith.addf %21, %22 : vector<8x48xf32>
    %cst_13 = arith.constant 0.000000e+00 : f32
    %24 = vector.broadcast %cst_13 : f32 to vector<8x48xf32>
    %25 = arith.subf %24, %23 : vector<8x48xf32>
    %26 = math.exp %25 : vector<8x48xf32>
    %cst_14 = arith.constant 1.000000e+00 : f32
    %27 = vector.broadcast %cst_14 : f32 to vector<8x48xf32>
    %28 = arith.addf %27, %26 : vector<8x48xf32>
    %29 = tpu.reciprocal %28 {approx = true} : vector<8x48xf32> -> vector<8x48xf32>
    %c152 = arith.constant 152 : index
    %c0_15 = arith.constant 0 : index
    %30 = vector.load %arg2[%c152, %c0_15] : memref<272x128xf32, #tpu.memory_space<vmem>>, vector<48x7xf32>
    %c267 = arith.constant 267 : index
    %c0_16 = arith.constant 0 : index
    %31 = vector.load %arg2[%c267, %c0_16] : memref<272x128xf32, #tpu.memory_space<vmem>>, vector<1x7xf32>
    %cst_17 = arith.constant dense<0.000000e+00> : vector<8x7xf32>
    %32 = tpu.matmul %29, %30, %cst_17 {dimension_numbers = #tpu.dot_dimension_numbers<[1], [0], [0], [1], [0, 0, 1, 1], [], []>} : vector<8x48xf32>, vector<48x7xf32>, vector<8x7xf32> -> vector<8x7xf32>
    %33 = vector.broadcast %31 : vector<1x7xf32> to vector<8x7xf32>
    %34 = arith.addf %32, %33 : vector<8x7xf32>
    %cst_18 = arith.constant 0.000000e+00 : f32
    %35 = vector.broadcast %cst_18 : f32 to vector<8x7xf32>
    %36 = arith.subf %35, %34 : vector<8x7xf32>
    %37 = math.exp %36 : vector<8x7xf32>
    %cst_19 = arith.constant 1.000000e+00 : f32
    %38 = vector.broadcast %cst_19 : f32 to vector<8x7xf32>
    %39 = arith.addf %38, %37 : vector<8x7xf32>
    %40 = tpu.reciprocal %39 {approx = true} : vector<8x7xf32> -> vector<8x7xf32>
    %c200 = arith.constant 200 : index
    %c0_20 = arith.constant 0 : index
    %41 = vector.load %arg2[%c200, %c0_20] : memref<272x128xf32, #tpu.memory_space<vmem>>, vector<7x8xf32>
    %c208 = arith.constant 208 : index
    %c0_21 = arith.constant 0 : index
    %42 = vector.load %arg2[%c208, %c0_21] : memref<272x128xf32, #tpu.memory_space<vmem>>, vector<48x8xf32>
    %c268 = arith.constant 268 : index
    %c0_22 = arith.constant 0 : index
    %43 = vector.load %arg2[%c268, %c0_22] : memref<272x128xf32, #tpu.memory_space<vmem>>, vector<1x8xf32>
    %cst_23 = arith.constant dense<0.000000e+00> : vector<8x8xf32>
    %44 = tpu.matmul %40, %41, %cst_23 {dimension_numbers = #tpu.dot_dimension_numbers<[1], [0], [0], [1], [0, 0, 1, 1], [], []>} : vector<8x7xf32>, vector<7x8xf32>, vector<8x8xf32> -> vector<8x8xf32>
    %cst_24 = arith.constant dense<0.000000e+00> : vector<8x8xf32>
    %45 = tpu.matmul %29, %42, %cst_24 {dimension_numbers = #tpu.dot_dimension_numbers<[1], [0], [0], [1], [0, 0, 1, 1], [], []>} : vector<8x48xf32>, vector<48x8xf32>, vector<8x8xf32> -> vector<8x8xf32>
    %46 = arith.addf %44, %45 : vector<8x8xf32>
    %47 = vector.broadcast %43 : vector<1x8xf32> to vector<8x8xf32>
    %48 = arith.addf %46, %47 : vector<8x8xf32>
    %cst_25 = arith.constant 0.000000e+00 : f32
    %49 = vector.broadcast %cst_25 : f32 to vector<8x8xf32>
    %50 = arith.subf %49, %48 : vector<8x8xf32>
    %51 = math.exp %50 : vector<8x8xf32>
    %cst_26 = arith.constant 1.000000e+00 : f32
    %52 = vector.broadcast %cst_26 : f32 to vector<8x8xf32>
    %53 = arith.addf %52, %51 : vector<8x8xf32>
    %54 = tpu.reciprocal %53 {approx = true} : vector<8x8xf32> -> vector<8x8xf32>
    %c256 = arith.constant 256 : index
    %c0_27 = arith.constant 0 : index
    %55 = vector.load %arg2[%c256, %c0_27] : memref<272x128xf32, #tpu.memory_space<vmem>>, vector<8x3xf32>
    %c269 = arith.constant 269 : index
    %c0_28 = arith.constant 0 : index
    %56 = vector.load %arg2[%c269, %c0_28] : memref<272x128xf32, #tpu.memory_space<vmem>>, vector<1x3xf32>
    %cst_29 = arith.constant dense<0.000000e+00> : vector<8x3xf32>
    %57 = tpu.matmul %54, %55, %cst_29 {dimension_numbers = #tpu.dot_dimension_numbers<[1], [0], [0], [1], [0, 0, 1, 1], [], []>} : vector<8x8xf32>, vector<8x3xf32>, vector<8x3xf32> -> vector<8x3xf32>
    %58 = vector.broadcast %56 : vector<1x3xf32> to vector<8x3xf32>
    %59 = arith.addf %57, %58 : vector<8x3xf32>
    %cst_30 = arith.constant 0.000000e+00 : f32
    %60 = vector.broadcast %cst_30 : f32 to vector<8x3xf32>
    %61 = arith.subf %60, %59 : vector<8x3xf32>
    %62 = math.exp %61 : vector<8x3xf32>
    %cst_31 = arith.constant 1.000000e+00 : f32
    %63 = vector.broadcast %cst_31 : f32 to vector<8x3xf32>
    %64 = arith.addf %63, %62 : vector<8x3xf32>
    %65 = tpu.reciprocal %64 {approx = true} : vector<8x3xf32> -> vector<8x3xf32>
    %cst_32 = arith.constant 0.000000e+00 : f32
    %66 = vector.broadcast %cst_32 : f32 to vector<8x118xf32>
    %67 = tpu.concatenate %40, %65, %66 in 1 : vector<8x7xf32>, vector<8x3xf32>, vector<8x118xf32> -> vector<8x128xf32>
    %c0_33 = arith.constant 0 : index
    %c0_34 = arith.constant 0 : index
    %68 = vector.load %arg3[%c0_33, %c0_34] : memref<8x128xf32, #tpu.memory_space<vmem>>, vector<8x128xf32>
    tpu.vector_store %arg3[%c0_33, %c0_34], %67 {strides = array<i32>} : memref<8x128xf32, #tpu.memory_space<vmem>>, vector<8x128xf32>,
    return
  }
  func.func @transform_0(%arg0: i32) -> (i32, i32) {
    %c0_i32 = arith.constant 0 : i32
    %c0_i32_0 = arith.constant 0 : i32
    return %arg0, %c0_i32 : i32, i32
  }
  func.func @transform_1(%arg0: i32) -> (i32, i32) {
    %c0_i32 = arith.constant 0 : i32
    %c0_i32_0 = arith.constant 0 : i32
    %c0_i32_1 = arith.constant 0 : i32
    return %c0_i32, %c0_i32_0 : i32, i32
  }
  func.func @transform_2(%arg0: i32) -> (i32, i32) {
    %c0_i32 = arith.constant 0 : i32
    %c0_i32_0 = arith.constant 0 : i32
    return %arg0, %c0_i32 : i32, i32
  }
}

</mosaic_0001>

<llo_original>
// kernel: tpu_custom_call.1
$region0: #{tpu_custom_call.1}
  #allocation0 [shape = 'u32[]', space=smem, size = 0x4, offset = 0x4, fixed_abs, tag = 'smem constant byte address 0x4 - core index']
  #allocation1 [shape = 'u32[72,128]{1,0:T(1,128)}', space=vmem, size = 0x9000, scoped, tag = 'internal scratch']
  %s0 = inlined_call_operand.hbm [shape: f32[8,56], index: 0, kind: input, shape index: {}]
  %s1 = inlined_call_operand.hbm [shape: f32[272,128], index: 1, kind: input, shape index: {}]
  %s2 = inlined_call_operand.hbm [shape: f32[8,128], index: 2, kind: output, shape index: {}]
  %s3 = sld [smem:[#allocation0]]
  $region26: #{tpu_custom_call.1} parent=0
    _
  %s5 = ssub.s32 1, %s3
  %s6 = scalar_select 0, %s5, %s3
  $region1: #{tpu_custom_call.1} parent=0
    #allocation2 [shape = 'u8[4096]{0}', space=vmem, size = 0x1000, scoped, tag = 'input window, operand 0, single buffered']
    #allocation3 [shape = 's32[1]{0}', space=sflag, size = 0x4, scoped, tag = 'scoped memory for tpu_custom_call.1']
    #allocation4 [shape = 's32[1]{0}', space=sflag, size = 0x4, scoped, tag = 'scoped memory for tpu_custom_call.1']
    #allocation5 [shape = 'u8[139264]{0}', space=vmem, size = 0x22000, scoped, tag = 'input window, operand 1, single buffered']
    #allocation6 [shape = 's32[1]{0}', space=sflag, size = 0x4, scoped, tag = 'scoped memory for tpu_custom_call.1']
    #allocation7 [shape = 'u8[4096]{0}', space=vmem, size = 0x1000, scoped, tag = 'output window, operand 0, single buffered']
    %7 = vsyncpa [#allocation3], 0
    %8 = vsyncpa [#allocation6], 0
    %9 = vsyncpa [#allocation4], 0
    // Predicated region
    $region2: #{tpu_custom_call.1} parent=1 // pred_check
      _
    $region3: #{tpu_custom_call.1} parent=1 // pred_check_branch
      %11 = sbr.rel (0) target = $region5
    $region4: #{tpu_custom_call.1} parent=1 // pred_region
      %13 = vsyncadd [#allocation3], 0
      %s15 = sshll.u32 %s0, 4
      %s16 = int_to_ptr.hbm [resolvable:$true] %s15
      %s17 = sshll.u32 [#allocation2], 4
      %s18 = int_to_ptr.vmem [resolvable:$true] %s17
      %20 = dma.hbm_to_vmem [thread:$0]  %s16, 128, %s18, [#allocation3]
    $region5: #{tpu_custom_call.1} parent=1 // pred_fallthru
      _
    // Predicated region
    $region6: #{tpu_custom_call.1} parent=1 // pred_check
      _
    $region7: #{tpu_custom_call.1} parent=1 // pred_check_branch
      %22 = sbr.rel (0) target = $region9
    $region8: #{tpu_custom_call.1} parent=1 // pred_region
      %24 = vsyncadd [#allocation6], 0
      %s25 = sshll.u32 %s1, 4
      %s26 = int_to_ptr.hbm [resolvable:$true] %s25
      %s27 = sshll.u32 [#allocation5], 4
      %s28 = int_to_ptr.vmem [resolvable:$true] %s27
      %33 = dma.hbm_to_vmem [thread:$0]  %s26, 4352, %s28, [#allocation6], 128, 128, 8
    $region9: #{tpu_custom_call.1} parent=1 // pred_fallthru
      _
    // Predicated region
    $region10: #{tpu_custom_call.1} parent=1 // pred_check
      _
    $region11: #{tpu_custom_call.1} parent=1 // pred_check_branch
      %35 = sbr.rel (0) target = $region13
    $region12: #{tpu_custom_call.1} parent=1 // pred_region
      %37 = dma.done [#allocation3], 128
    $region13: #{tpu_custom_call.1} parent=1 // pred_fallthru
      _
    // Predicated region
    $region14: #{tpu_custom_call.1} parent=1 // pred_check
      _
    $region15: #{tpu_custom_call.1} parent=1 // pred_check_branch
      %39 = sbr.rel (0) target = $region17
    $region16: #{tpu_custom_call.1} parent=1 // pred_region
      %41 = dma.done [#allocation6], 4352
    $region17: #{tpu_custom_call.1} parent=1 // pred_fallthru
      _
    %v42 = vld [vmem:[#allocation2] sm:$0xff]
    %v43 = vld [vmem:[#allocation5] sm:$0xff]
    %v44 = vld [vmem:[#allocation5 + $0x8] sm:$0xff]
    %v45 = vld [vmem:[#allocation5 + $0x10] sm:$0xff]
    %v46 = vld [vmem:[#allocation5 + $0x18] sm:$0xff]
    %v47 = vld [vmem:[#allocation5 + $0x20] sm:$0xff]
    %v48 = vld [vmem:[#allocation5 + $0x28] sm:$0xff]
    %v49 = vld [vmem:[#allocation5 + $0x30] sm:$0xff]
    %v50 = vld [vmem:[#allocation5 + $0x108] sm:$0x1]
    %v51 = vperm.slane %v50, 0
    %vm52 = vcmask 457728
    %v54 = vsel %vm52, %v42, 0
    %56 = vmatpush.msra.mxu0 0.0
    %57 = vmatpush.msra.mxu0 0.0
    %58 = vmatpush.msra.mxu0 0.0
    %59 = vmatpush.msra.mxu0 0.0
    %60 = vmatpush.msra.mxu0 0.0
    %61 = vmatpush.msra.mxu0 0.0
    %62 = vmatpush.msra.mxu0 0.0
    %63 = vmatpush.msra.mxu0 0.0
    %64 = vmatpush.msra.mxu0 0.0
    %65 = vmatpush.msra.mxu0 %v49
    %66 = vmatpush.msra.mxu0 %v48
    %67 = vmatpush.msra.mxu0 %v47
    %68 = vmatpush.msra.mxu0 %v46
    %69 = vmatpush.msra.mxu0 %v45
    %70 = vmatpush.msra.mxu0 %v44
    %71 = vmatpush.msra.mxu0 %v43
    %72 = vmatmul.f32.gmra.mxu0 %v54
    %v73 = vpop.f32.mrf.mxu0
    %v74 = vadd.f32 %v51, %v73
    %75 = vdwg.mxu0
    %v76 = vmax.f32 %v74, 0.0
    %v77 = vld [vmem:[#allocation5 + $0x38] sm:$0xff]
    %v78 = vld [vmem:[#allocation5 + $0x40] sm:$0xff]
    %v79 = vld [vmem:[#allocation5 + $0x48] sm:$0xff]
    %v80 = vld [vmem:[#allocation5 + $0x50] sm:$0xff]
    %v81 = vld [vmem:[#allocation5 + $0x58] sm:$0xff]
    %v82 = vld [vmem:[#allocation5 + $0x60] sm:$0xff]
    %v83 = vld [vmem:[#allocation5 + $0x68] sm:$0xff]
    %v84 = vld [vmem:[#allocation5 + $0x70] sm:$0xff]
    %v85 = vld [vmem:[#allocation5 + $0x109] sm:$0x1]
    %v86 = vperm.slane %v85, 0
    %vm87 = vcmask 523264
    %v89 = vsel %vm87, %v76, 0
    %91 = vmatpush.msra.mxu0 0.0
    %92 = vmatpush.msra.mxu0 0.0
    %93 = vmatpush.msra.mxu0 0.0
    %94 = vmatpush.msra.mxu0 0.0
    %95 = vmatpush.msra.mxu0 0.0
    %96 = vmatpush.msra.mxu0 0.0
    %97 = vmatpush.msra.mxu0 0.0
    %98 = vmatpush.msra.mxu0 0.0
    %99 = vmatpush.msra.mxu0 %v84
    %100 = vmatpush.msra.mxu0 %v83
    %101 = vmatpush.msra.mxu0 %v82
    %102 = vmatpush.msra.mxu0 %v81
    %103 = vmatpush.msra.mxu0 %v80
    %104 = vmatpush.msra.mxu0 %v79
    %105 = vmatpush.msra.mxu0 %v78
    %106 = vmatpush.msra.mxu0 %v77
    %107 = vmatmul.f32.gmra.mxu0 %v89
    %v108 = vpop.f32.mrf.mxu0
    %v109 = vadd.f32 %v86, %v108
    %110 = vdwg.mxu0
    %v111 = vsub.f32 0.0, %v109
    %v112 = vmul.f32 %v111, 1.442695
    %v113 = vpow.pop %v112
    %v114 = vadd.f32 %v113, 1.0
    %v115 = vrcp.pop %v114
    %v116 = vld [vmem:[#allocation5 + $0x78] sm:$0xff]
    %v117 = vld [vmem:[#allocation5 + $0x80] sm:$0xff]
    %v118 = vld [vmem:[#allocation5 + $0x88] sm:$0xff]
    %v119 = vld [vmem:[#allocation5 + $0x90] sm:$0xff]
    %v120 = vld [vmem:[#allocation5 + $0x10a] sm:$0x1]
    %v121 = vperm.slane %v120, 0
    %vm122 = vcmask 261120
    %v124 = vsel %vm122, %v115, 0
    %126 = vmatpush.msra.mxu0 0.0
    %127 = vmatpush.msra.mxu0 0.0
    %128 = vmatpush.msra.mxu0 0.0
    %129 = vmatpush.msra.mxu0 0.0
    %130 = vmatpush.msra.mxu0 0.0
    %131 = vmatpush.msra.mxu0 0.0
    %132 = vmatpush.msra.mxu0 0.0
    %133 = vmatpush.msra.mxu0 0.0
    %134 = vmatpush.msra.mxu0 0.0
    %135 = vmatpush.msra.mxu0 0.0
    %136 = vmatpush.msra.mxu0 0.0
    %137 = vmatpush.msra.mxu0 0.0
    %138 = vmatpush.msra.mxu0 %v119
    %139 = vmatpush.msra.mxu0 %v118
    %140 = vmatpush.msra.mxu0 %v117
    %141 = vmatpush.msra.mxu0 %v116
    %142 = vmatmul.f32.gmra.mxu0 %v124
    %v143 = vpop.f32.mrf.mxu0
    %v144 = vadd.f32 %v121, %v143
    %145 = vdwg.mxu0
    %v146 = vsub.f32 0.0, %v144
    %v147 = vmul.f32 %v146, 1.442695
    %v148 = vpow.pop %v147
    %v149 = vadd.f32 %v148, 1.0
    %v150 = vrcp.pop %v149
    %v151 = vld [vmem:[#allocation5 + $0x98] sm:$0xff]
    %v152 = vld [vmem:[#allocation5 + $0xa0] sm:$0xff]
    %v153 = vld [vmem:[#allocation5 + $0xa8] sm:$0xff]
    %v154 = vld [vmem:[#allocation5 + $0xb0] sm:$0xff]
    %v155 = vld [vmem:[#allocation5 + $0xb8] sm:$0xff]
    %v156 = vld [vmem:[#allocation5 + $0xc0] sm:$0xff]
    %v157 = vld [vmem:[#allocation5 + $0x10b] sm:$0x1]
    %v158 = vperm.slane %v157, 0
    %vm159 = vcmask 392192
    %v161 = vsel %vm159, %v150, 0
    %163 = vmatpush.msra.mxu0 0.0
    %164 = vmatpush.msra.mxu0 0.0
    %165 = vmatpush.msra.mxu0 0.0
    %166 = vmatpush.msra.mxu0 0.0
    %167 = vmatpush.msra.mxu0 0.0
    %168 = vmatpush.msra.mxu0 0.0
    %169 = vmatpush.msra.mxu0 0.0
    %170 = vmatpush.msra.mxu0 0.0
    %171 = vmatpush.msra.mxu0 0.0
    %172 = vmatpush.msra.mxu0 0.0
    %173 = vmatpush.msra.mxu0 %v156
    %174 = vmatpush.msra.mxu0 %v155
    %175 = vmatpush.msra.mxu0 %v154
    %176 = vmatpush.msra.mxu0 %v153
    %177 = vmatpush.msra.mxu0 %v152
    %178 = vmatpush.msra.mxu0 %v151
    %179 = vmatmul.f32.gmra.mxu0 %v161
    %v180 = vpop.f32.mrf.mxu0
    %v181 = vadd.f32 %v158, %v180
    %182 = vdwg.mxu0
    %v183 = vsub.f32 0.0, %v181
    %v184 = vmul.f32 %v183, 1.442695
    %v185 = vpow.pop %v184
    %v186 = vadd.f32 %v185, 1.0
    %v187 = vrcp.pop %v186
    %v188 = vld [vmem:[#allocation5 + $0xc8] sm:$0x7f]
    %v189 = vld [vmem:[#allocation5 + $0xd0] sm:$0xff]
    %v190 = vld [vmem:[#allocation5 + $0xd8] sm:$0xff]
    %v191 = vld [vmem:[#allocation5 + $0xe0] sm:$0xff]
    %v192 = vld [vmem:[#allocation5 + $0xe8] sm:$0xff]
    %v193 = vld [vmem:[#allocation5 + $0xf0] sm:$0xff]
    %v194 = vld [vmem:[#allocation5 + $0xf8] sm:$0xff]
    %v195 = vld [vmem:[#allocation5 + $0x10c] sm:$0x1]
    %196 = vmatpush.msra.mxu0 0.0
    %197 = vmatpush.msra.mxu0 0.0
    %198 = vmatpush.msra.mxu0 0.0
    %199 = vmatpush.msra.mxu0 0.0
    %200 = vmatpush.msra.mxu0 0.0
    %201 = vmatpush.msra.mxu0 0.0
    %202 = vmatpush.msra.mxu0 0.0
    %203 = vmatpush.msra.mxu0 0.0
    %204 = vmatpush.msra.mxu0 0.0
    %205 = vmatpush.msra.mxu0 0.0
    %206 = vmatpush.msra.mxu0 %v194
    %207 = vmatpush.msra.mxu0 %v193
    %208 = vmatpush.msra.mxu0 %v192
    %209 = vmatpush.msra.mxu0 %v191
    %210 = vmatpush.msra.mxu0 %v190
    %211 = vmatpush.msra.mxu0 %v189
    %212 = vmatmul.f32.gmra.mxu0 %v161
    %v213 = vpop.f32.mrf.mxu0
    %v214 = vadd.f32 0.0, %v213
    %215 = vdwg.mxu0
    %vm216 = vcmask 56320
    %v218 = vsel %vm216, %v187, 0
    %vm220 = vcmask 1046528
    %v222 = vsel %vm220, %v188, 0
    %224 = vmatpush.msra.mxu0 0.0
    %225 = vmatpush.msra.mxu0 0.0
    %226 = vmatpush.msra.mxu0 0.0
    %227 = vmatpush.msra.mxu0 0.0
    %228 = vmatpush.msra.mxu0 0.0
    %229 = vmatpush.msra.mxu0 0.0
    %230 = vmatpush.msra.mxu0 0.0
    %231 = vmatpush.msra.mxu0 0.0
    %232 = vmatpush.msra.mxu0 0.0
    %233 = vmatpush.msra.mxu0 0.0
    %234 = vmatpush.msra.mxu0 0.0
    %235 = vmatpush.msra.mxu0 0.0
    %236 = vmatpush.msra.mxu0 0.0
    %237 = vmatpush.msra.mxu0 0.0
    %238 = vmatpush.msra.mxu0 0.0
    %239 = vmatpush.msra.mxu0 %v222
    %240 = vmatmul.f32.gmra.mxu0 %v218
    %v241 = vpop.f32.mrf.mxu0
    %v242 = vadd.f32 %v214, %v241
    %243 = vdwg.mxu0
    %v244 = vperm.slane %v195, 0
    %v245 = vadd.f32 %v242, %v244
    %v246 = vsub.f32 0.0, %v245
    %v247 = vmul.f32 %v246, 1.442695
    %v248 = vpow.pop %v247
    %v249 = vadd.f32 %v248, 1.0
    %v250 = vrcp.pop %v249
    %v251 = vld [vmem:[#allocation5 + $0x100] sm:$0xff]
    %v252 = vld [vmem:[#allocation5 + $0x10d] sm:$0x1]
    %v253 = vperm.slane %v252, 0
    %vm254 = vcmask 64512
    %v256 = vsel %vm254, %v250, 0
    %258 = vmatpush.msra.mxu0 0.0
    %259 = vmatpush.msra.mxu0 0.0
    %260 = vmatpush.msra.mxu0 0.0
    %261 = vmatpush.msra.mxu0 0.0
    %262 = vmatpush.msra.mxu0 0.0
    %263 = vmatpush.msra.mxu0 0.0
    %264 = vmatpush.msra.mxu0 0.0
    %265 = vmatpush.msra.mxu0 0.0
    %266 = vmatpush.msra.mxu0 0.0
    %267 = vmatpush.msra.mxu0 0.0
    %268 = vmatpush.msra.mxu0 0.0
    %269 = vmatpush.msra.mxu0 0.0
    %270 = vmatpush.msra.mxu0 0.0
    %271 = vmatpush.msra.mxu0 0.0
    %272 = vmatpush.msra.mxu0 0.0
    %273 = vmatpush.msra.mxu0 %v251
    %274 = vmatmul.f32.gmra.mxu0 %v256
    %v275 = vpop.f32.mrf.mxu0
    %v276 = vadd.f32 %v253, %v275
    %277 = vdwg.mxu0
    %v278 = vsub.f32 0.0, %v276
    %v279 = vmul.f32 %v278, 1.442695
    %v280 = vpow.pop %v279
    %v281 = vadd.f32 %v280, 1.0
    %v282 = vrcp.pop %v281
    %284 = vrot.lane.b32.xlu0 %v282, 7
    %v285 = vpop.permute.xlu0 %284
    %v287 = vsel %vm216, %v187, %v285
    %vm288 = vcmask 80896
    %v289 = vsel %vm288, %v287, 0.0
    %290 = vst [vmem:[#allocation7] sm:$0xff] %v289
    // Predicated region
    $region18: #{tpu_custom_call.1} parent=1 // pred_check
      _
    $region19: #{tpu_custom_call.1} parent=1 // pred_check_branch
      %292 = sbr.rel (0) target = $region21
    $region20: #{tpu_custom_call.1} parent=1 // pred_region
      %294 = vsyncadd [#allocation4], 0
      %s296 = sshll.u32 [#allocation7], 4
      %s297 = int_to_ptr.vmem [resolvable:$true] %s296
      %s298 = sshll.u32 %s2, 4
      %s299 = int_to_ptr.hbm [resolvable:$true] %s298
      %301 = dma.vmem_to_hbm [thread:$0]  %s297, 128, %s299, [#allocation4]
    $region21: #{tpu_custom_call.1} parent=1 // pred_fallthru
      _
    // Predicated region
    $region22: #{tpu_custom_call.1} parent=1 // pred_check
      _
    $region23: #{tpu_custom_call.1} parent=1 // pred_check_branch
      %303 = sbr.rel (0) target = $region25
    $region24: #{tpu_custom_call.1} parent=1 // pred_region
      %305 = dma.done [#allocation4], 128
    $region25: #{tpu_custom_call.1} parent=1 // pred_fallthru
      _
    %306 = vsyncpa [#allocation3], 1
    %307 = vsyncpa [#allocation6], 1
    %308 = vsyncpa [#allocation4], 1

</llo_original>
